<compile_context>
chip_gen: v5e
topology: v5e:2x2
jax: 0.10.0
libtpu: 0.0.40
codegen_flags: <defaults>
</compile_context>

<pallas_src>
import jax
import jax.numpy as jnp
from jax import lax
from jax.experimental import pallas as pl
from jax.experimental.pallas import tpu as pltpu

EPS = 1e-5
LANE = 128


def _gcn_kernel(x_ref, adj_ref,
                w1_ref, b1_ref, g1_ref, be1_ref,
                w2_ref, b2_ref, g2_ref, be2_ref,
                out_ref):
    x = x_ref[...]          # (N, Cin_pad)
    adj = adj_ref[...]      # (N, N)
    n = adj.shape[0]

    # deg[j] = sum_i (A+I)[i, j] = colsum(A)[j] + 1  (>= 1 always with self loops).
    # Computed as A^T @ ones so it lands directly in (N, 1) orientation (no transpose).
    ones_c = jnp.ones((n, 1), jnp.float32)
    deg = lax.dot_general(adj, ones_c,
                          dimension_numbers=(((0,), (0,)), ((), ())),
                          preferred_element_type=jnp.float32) + 1.0      # (N, 1)
    dis = lax.rsqrt(deg)                                                 # D^{-1/2}

    def gcn_layer(h, w, b):
        hw = jnp.dot(h, w, preferred_element_type=jnp.float32)           # X @ W
        s = dis * hw                                                      # scale source nodes
        # (A + I)^T @ s == A^T @ s + s : transposed-LHS contraction on the MXU.
        agg = lax.dot_general(adj, s,
                              dimension_numbers=(((0,), (0,)), ((), ())),
                              preferred_element_type=jnp.float32) + s
        return dis * agg + b                                              # scale targets, add bias

    def batchnorm(h, gamma, beta):
        # BatchNorm1d training mode: batch mean / biased variance over nodes (one pass).
        mean = jnp.mean(h, axis=0, keepdims=True)
        var = jnp.mean(h * h, axis=0, keepdims=True) - mean * mean
        return (h - mean) * lax.rsqrt(var + EPS) * gamma + beta

    h1 = gcn_layer(x, w1_ref[...], b1_ref[...])
    h1 = jnp.maximum(batchnorm(h1, g1_ref[...], be1_ref[...]), 0.0)

    h2 = gcn_layer(h1, w2_ref[...], b2_ref[...])
    out_ref[...] = batchnorm(h2, g2_ref[...], be2_ref[...])


def _round_up(c, m=LANE):
    return ((c + m - 1) // m) * m


def _pad2d(a, rows, cols):
    return jnp.pad(a, ((0, rows - a.shape[0]), (0, cols - a.shape[1])))


def gcn_forward(x, adj, params):
    """x: (B, N, C_in) node features; adj: (B, N, N) dense adjacency (zero diagonal)."""
    x = x.astype(jnp.float32)
    adj = adj.astype(jnp.float32)
    B, N, c_in = x.shape
    c_hid = params["w1"].shape[1]
    c_out = params["w2"].shape[1]

    # Lane-dense zero padding of the channel dims; padded channels propagate as exact
    # zeros through matmul / BN(beta=0) / ReLU and are sliced off at the end.
    ci, ch, co = _round_up(c_in), _round_up(c_hid), _round_up(c_out)
    x_p = jnp.pad(x, ((0, 0), (0, 0), (0, ci - c_in)))
    w1 = _pad2d(params["w1"].astype(jnp.float32), ci, ch)
    w2 = _pad2d(params["w2"].astype(jnp.float32), ch, co)
    row = lambda v, c: _pad2d(v.astype(jnp.float32).reshape(1, -1), 1, c)
    b1, g1, be1 = row(params["b1"], ch), row(params["g1"], ch), row(params["be1"], ch)
    b2, g2, be2 = row(params["b2"], co), row(params["g2"], co), row(params["be2"], co)

    per_graph = lambda shape: pl.BlockSpec((None,) + shape, lambda b: (b, 0, 0))
    shared = lambda shape: pl.BlockSpec(shape, lambda b: (0,) * len(shape))

    out = pl.pallas_call(
        _gcn_kernel,
        grid=(B,),
        out_shape=jax.ShapeDtypeStruct((B, N, co), jnp.float32),
        in_specs=[
            per_graph((N, ci)),            # x (per graph)
            per_graph((N, N)),             # adj (per graph)
            shared((ci, ch)), shared((1, ch)), shared((1, ch)), shared((1, ch)),
            shared((ch, co)), shared((1, co)), shared((1, co)), shared((1, co)),
        ],
        out_specs=per_graph((N, co)),
        compiler_params=pltpu.CompilerParams(
            dimension_semantics=("parallel",)),
    )(x_p, adj, w1, b1, g1, be1, w2, b2, g2, be2)
    return out[..., :c_out]


if __name__ == "__main__":
    key = jax.random.PRNGKey(0)
    k_x, k_adj, k_w1, k_w2 = jax.random.split(key, 4)

    B, N, C_IN, C_HID, C_OUT = 2, 16, 8, 32, 16

    x = jax.random.normal(k_x, (B, N, C_IN), dtype=jnp.float32)

    # Symmetric 0/1 adjacency per graph, zero diagonal (so A+I matches add_self_loops).
    a = (jax.random.uniform(k_adj, (B, N, N)) < 0.3).astype(jnp.float32)
    upper = jnp.triu(a, k=1)
    adj = upper + jnp.swapaxes(upper, -1, -2)

    # Deterministic parameter init (matches module __init__ shapes; GCNConv bias = 0,
    # BatchNorm weight = 1, bias = 0 as in fresh PyTorch init).
    params = {
        "w1": jax.random.normal(k_w1, (C_IN, C_HID), jnp.float32) / jnp.sqrt(C_IN),
        "b1": jnp.zeros((C_HID,), jnp.float32),
        "g1": jnp.ones((C_HID,), jnp.float32),
        "be1": jnp.zeros((C_HID,), jnp.float32),
        "w2": jax.random.normal(k_w2, (C_HID, C_OUT), jnp.float32) / jnp.sqrt(C_HID),
        "b2": jnp.zeros((C_OUT,), jnp.float32),
        "g2": jnp.ones((C_OUT,), jnp.float32),
        "be2": jnp.zeros((C_OUT,), jnp.float32),
    }

    out = gcn_forward(x, adj, params)
    jax.block_until_ready(out)
    assert out.shape == (B, N, C_OUT)
    print("KERNEL_OK")
</pallas_src>

<mosaic_0001>
module attributes {stable_mosaic.version = 11 : i64} {
  func.func @_gcn_kernel(%arg0: i32, %arg1: memref<1x16x128xf32, #tpu.memory_space<vmem>>, %arg2: memref<1x16x16xf32, #tpu.memory_space<vmem>>, %arg3: memref<128x128xf32, #tpu.memory_space<vmem>>, %arg4: memref<1x128xf32, #tpu.memory_space<vmem>>, %arg5: memref<1x128xf32, #tpu.memory_space<vmem>>, %arg6: memref<1x128xf32, #tpu.memory_space<vmem>>, %arg7: memref<128x128xf32, #tpu.memory_space<vmem>>, %arg8: memref<1x128xf32, #tpu.memory_space<vmem>>, %arg9: memref<1x128xf32, #tpu.memory_space<vmem>>, %arg10: memref<1x128xf32, #tpu.memory_space<vmem>>, %arg11: memref<1x16x128xf32, #tpu.memory_space<vmem>>) attributes {dimension_semantics = [#tpu.dimension_semantics<parallel>], iteration_bounds = array<i64: 2>, scalar_prefetch = 0 : i64, scratch_operands = 0 : i64, tpu.core_type = #tpu.core_type<tc>, window_params = [{transform_indices = @transform_0, window_bounds = array<i64: 1, 16, 128>}, {transform_indices = @transform_1, window_bounds = array<i64: 1, 16, 16>}, {pipeline_mode = #tpu.pipeline_mode<synchronous>, transform_indices = @transform_2, window_bounds = array<i64: 128, 128>}, {pipeline_mode = #tpu.pipeline_mode<synchronous>, transform_indices = @transform_3, window_bounds = array<i64: 1, 128>}, {pipeline_mode = #tpu.pipeline_mode<synchronous>, transform_indices = @transform_4, window_bounds = array<i64: 1, 128>}, {pipeline_mode = #tpu.pipeline_mode<synchronous>, transform_indices = @transform_5, window_bounds = array<i64: 1, 128>}, {pipeline_mode = #tpu.pipeline_mode<synchronous>, transform_indices = @transform_6, window_bounds = array<i64: 128, 128>}, {pipeline_mode = #tpu.pipeline_mode<synchronous>, transform_indices = @transform_7, window_bounds = array<i64: 1, 128>}, {pipeline_mode = #tpu.pipeline_mode<synchronous>, transform_indices = @transform_8, window_bounds = array<i64: 1, 128>}, {pipeline_mode = #tpu.pipeline_mode<synchronous>, transform_indices = @transform_9, window_bounds = array<i64: 1, 128>}, {transform_indices = @transform_10, window_bounds = array<i64: 1, 16, 128>}]} {
    %c0 = arith.constant 0 : index
    %c0_0 = arith.constant 0 : index
    %c0_1 = arith.constant 0 : index
    %0 = vector.load %arg1[%c0, %c0_0, %c0_1] : memref<1x16x128xf32, #tpu.memory_space<vmem>>, vector<1x16x128xf32>
    %1 = vector.shape_cast %0 : vector<1x16x128xf32> to vector<16x128xf32>
    %c0_2 = arith.constant 0 : index
    %c0_3 = arith.constant 0 : index
    %c0_4 = arith.constant 0 : index
    %2 = vector.load %arg2[%c0_2, %c0_3, %c0_4] : memref<1x16x16xf32, #tpu.memory_space<vmem>>, vector<1x16x16xf32>
    %3 = vector.shape_cast %2 : vector<1x16x16xf32> to vector<16x16xf32>
    %cst = arith.constant 1.000000e+00 : f32
    %4 = vector.broadcast %cst : f32 to vector<16x1xf32>
    %cst_5 = arith.constant dense<0.000000e+00> : vector<16x1xf32>
    %5 = tpu.matmul %3, %4, %cst_5 {dimension_numbers = #tpu.dot_dimension_numbers<[0], [0], [1], [1], [0, 1, 1, 1], [], []>} : vector<16x16xf32>, vector<16x1xf32>, vector<16x1xf32> -> vector<16x1xf32>
    %cst_6 = arith.constant 1.000000e+00 : f32
    %6 = vector.broadcast %cst_6 : f32 to vector<16x1xf32>
    %7 = arith.addf %5, %6 : vector<16x1xf32>
    %8 = math.rsqrt %7 : vector<16x1xf32>
    %c0_7 = arith.constant 0 : index
    %c0_8 = arith.constant 0 : index
    %9 = vector.load %arg3[%c0_7, %c0_8] : memref<128x128xf32, #tpu.memory_space<vmem>>, vector<128x128xf32>
    %c0_9 = arith.constant 0 : index
    %c0_10 = arith.constant 0 : index
    %10 = vector.load %arg4[%c0_9, %c0_10] : memref<1x128xf32, #tpu.memory_space<vmem>>, vector<1x128xf32>
    %cst_11 = arith.constant dense<0.000000e+00> : vector<16x128xf32>
    %11 = tpu.matmul %1, %9, %cst_11 {dimension_numbers = #tpu.dot_dimension_numbers<[1], [0], [0], [1], [0, 0, 1, 1], [], []>} : vector<16x128xf32>, vector<128x128xf32>, vector<16x128xf32> -> vector<16x128xf32>
    %12 = vector.broadcast %8 : vector<16x1xf32> to vector<16x128xf32>
    %13 = arith.mulf %12, %11 : vector<16x128xf32>
    %cst_12 = arith.constant dense<0.000000e+00> : vector<16x128xf32>
    %14 = tpu.matmul %3, %13, %cst_12 {dimension_numbers = #tpu.dot_dimension_numbers<[0], [0], [1], [1], [0, 1, 1, 1], [], []>} : vector<16x16xf32>, vector<16x128xf32>, vector<16x128xf32> -> vector<16x128xf32>
    %15 = arith.addf %14, %13 : vector<16x128xf32>
    %16 = vector.broadcast %8 : vector<16x1xf32> to vector<16x128xf32>
    %17 = arith.mulf %16, %15 : vector<16x128xf32>
    %18 = vector.broadcast %10 : vector<1x128xf32> to vector<16x128xf32>
    %19 = arith.addf %17, %18 : vector<16x128xf32>
    %c0_13 = arith.constant 0 : index
    %c0_14 = arith.constant 0 : index
    %20 = vector.load %arg5[%c0_13, %c0_14] : memref<1x128xf32, #tpu.memory_space<vmem>>, vector<1x128xf32>
    %c0_15 = arith.constant 0 : index
    %c0_16 = arith.constant 0 : index
    %21 = vector.load %arg6[%c0_15, %c0_16] : memref<1x128xf32, #tpu.memory_space<vmem>>, vector<1x128xf32>
    %cst_17 = arith.constant dense<0.000000e+00> : vector<128xf32>
    %22 = vector.multi_reduction <add>, %19, %cst_17 [0] : vector<16x128xf32> to vector<128xf32>
    %23 = vector.shape_cast %22 : vector<128xf32> to vector<1x128xf32>
    %cst_18 = arith.constant 1.600000e+01 : f32
    %24 = vector.broadcast %cst_18 : f32 to vector<1x128xf32>
    %25 = arith.divf %23, %24 : vector<1x128xf32>
    %26 = arith.mulf %19, %19 : vector<16x128xf32>
    %cst_19 = arith.constant dense<0.000000e+00> : vector<128xf32>
    %27 = vector.multi_reduction <add>, %26, %cst_19 [0] : vector<16x128xf32> to vector<128xf32>
    %28 = vector.shape_cast %27 : vector<128xf32> to vector<1x128xf32>
    %cst_20 = arith.constant 1.600000e+01 : f32
    %29 = vector.broadcast %cst_20 : f32 to vector<1x128xf32>
    %30 = arith.divf %28, %29 : vector<1x128xf32>
    %31 = arith.mulf %25, %25 : vector<1x128xf32>
    %32 = arith.subf %30, %31 : vector<1x128xf32>
    %33 = vector.broadcast %25 : vector<1x128xf32> to vector<16x128xf32>
    %34 = arith.subf %19, %33 : vector<16x128xf32>
    %cst_21 = arith.constant 9.99999974E-6 : f32
    %35 = vector.broadcast %cst_21 : f32 to vector<1x128xf32>
    %36 = arith.addf %32, %35 : vector<1x128xf32>
    %37 = math.rsqrt %36 : vector<1x128xf32>
    %38 = vector.broadcast %37 : vector<1x128xf32> to vector<16x128xf32>
    %39 = arith.mulf %34, %38 : vector<16x128xf32>
    %40 = vector.broadcast %20 : vector<1x128xf32> to vector<16x128xf32>
    %41 = arith.mulf %39, %40 : vector<16x128xf32>
    %42 = vector.broadcast %21 : vector<1x128xf32> to vector<16x128xf32>
    %43 = arith.addf %41, %42 : vector<16x128xf32>
    %cst_22 = arith.constant 0.000000e+00 : f32
    %44 = vector.broadcast %cst_22 : f32 to vector<16x128xf32>
    %45 = arith.maximumf %43, %44 : vector<16x128xf32>
    %c0_23 = arith.constant 0 : index
    %c0_24 = arith.constant 0 : index
    %46 = vector.load %arg7[%c0_23, %c0_24] : memref<128x128xf32, #tpu.memory_space<vmem>>, vector<128x128xf32>
    %c0_25 = arith.constant 0 : index
    %c0_26 = arith.constant 0 : index
    %47 = vector.load %arg8[%c0_25, %c0_26] : memref<1x128xf32, #tpu.memory_space<vmem>>, vector<1x128xf32>
    %cst_27 = arith.constant dense<0.000000e+00> : vector<16x128xf32>
    %48 = tpu.matmul %45, %46, %cst_27 {dimension_numbers = #tpu.dot_dimension_numbers<[1], [0], [0], [1], [0, 0, 1, 1], [], []>} : vector<16x128xf32>, vector<128x128xf32>, vector<16x128xf32> -> vector<16x128xf32>
    %49 = vector.broadcast %8 : vector<16x1xf32> to vector<16x128xf32>
    %50 = arith.mulf %49, %48 : vector<16x128xf32>
    %cst_28 = arith.constant dense<0.000000e+00> : vector<16x128xf32>
    %51 = tpu.matmul %3, %50, %cst_28 {dimension_numbers = #tpu.dot_dimension_numbers<[0], [0], [1], [1], [0, 1, 1, 1], [], []>} : vector<16x16xf32>, vector<16x128xf32>, vector<16x128xf32> -> vector<16x128xf32>
    %52 = arith.addf %51, %50 : vector<16x128xf32>
    %53 = vector.broadcast %8 : vector<16x1xf32> to vector<16x128xf32>
    %54 = arith.mulf %53, %52 : vector<16x128xf32>
    %55 = vector.broadcast %47 : vector<1x128xf32> to vector<16x128xf32>
    %56 = arith.addf %54, %55 : vector<16x128xf32>
    %c0_29 = arith.constant 0 : index
    %c0_30 = arith.constant 0 : index
    %57 = vector.load %arg9[%c0_29, %c0_30] : memref<1x128xf32, #tpu.memory_space<vmem>>, vector<1x128xf32>
    %c0_31 = arith.constant 0 : index
    %c0_32 = arith.constant 0 : index
    %58 = vector.load %arg10[%c0_31, %c0_32] : memref<1x128xf32, #tpu.memory_space<vmem>>, vector<1x128xf32>
    %cst_33 = arith.constant dense<0.000000e+00> : vector<128xf32>
    %59 = vector.multi_reduction <add>, %56, %cst_33 [0] : vector<16x128xf32> to vector<128xf32>
    %60 = vector.shape_cast %59 : vector<128xf32> to vector<1x128xf32>
    %cst_34 = arith.constant 1.600000e+01 : f32
    %61 = vector.broadcast %cst_34 : f32 to vector<1x128xf32>
    %62 = arith.divf %60, %61 : vector<1x128xf32>
    %63 = arith.mulf %56, %56 : vector<16x128xf32>
    %cst_35 = arith.constant dense<0.000000e+00> : vector<128xf32>
    %64 = vector.multi_reduction <add>, %63, %cst_35 [0] : vector<16x128xf32> to vector<128xf32>
    %65 = vector.shape_cast %64 : vector<128xf32> to vector<1x128xf32>
    %cst_36 = arith.constant 1.600000e+01 : f32
    %66 = vector.broadcast %cst_36 : f32 to vector<1x128xf32>
    %67 = arith.divf %65, %66 : vector<1x128xf32>
    %68 = arith.mulf %62, %62 : vector<1x128xf32>
    %69 = arith.subf %67, %68 : vector<1x128xf32>
    %70 = vector.broadcast %62 : vector<1x128xf32> to vector<16x128xf32>
    %71 = arith.subf %56, %70 : vector<16x128xf32>
    %cst_37 = arith.constant 9.99999974E-6 : f32
    %72 = vector.broadcast %cst_37 : f32 to vector<1x128xf32>
    %73 = arith.addf %69, %72 : vector<1x128xf32>
    %74 = math.rsqrt %73 : vector<1x128xf32>
    %75 = vector.broadcast %74 : vector<1x128xf32> to vector<16x128xf32>
    %76 = arith.mulf %71, %75 : vector<16x128xf32>
    %77 = vector.broadcast %57 : vector<1x128xf32> to vector<16x128xf32>
    %78 = arith.mulf %76, %77 : vector<16x128xf32>
    %79 = vector.broadcast %58 : vector<1x128xf32> to vector<16x128xf32>
    %80 = arith.addf %78, %79 : vector<16x128xf32>
    %c0_38 = arith.constant 0 : index
    %c0_39 = arith.constant 0 : index
    %c0_40 = arith.constant 0 : index
    %81 = vector.load %arg11[%c0_38, %c0_39, %c0_40] : memref<1x16x128xf32, #tpu.memory_space<vmem>>, vector<1x16x128xf32>
    %82 = vector.shape_cast %81 : vector<1x16x128xf32> to vector<16x128xf32>
    %83 = vector.shape_cast %80 : vector<16x128xf32> to vector<1x16x128xf32>
    tpu.vector_store %arg11[%c0_38, %c0_39, %c0_40], %83 {strides = array<i32>} : memref<1x16x128xf32, #tpu.memory_space<vmem>>, vector<1x16x128xf32>,
    return
  }
  func.func @transform_0(%arg0: i32) -> (i32, i32, i32) {
    %c0_i32 = arith.constant 0 : i32
    %c0_i32_0 = arith.constant 0 : i32
    %c0_i32_1 = arith.constant 0 : i32
    return %arg0, %c0_i32, %c0_i32_0 : i32, i32, i32
  }
  func.func @transform_1(%arg0: i32) -> (i32, i32, i32) {
    %c0_i32 = arith.constant 0 : i32
    %c0_i32_0 = arith.constant 0 : i32
    %c0_i32_1 = arith.constant 0 : i32
    return %arg0, %c0_i32, %c0_i32_0 : i32, i32, i32
  }
  func.func @transform_2(%arg0: i32) -> (i32, i32) {
    %c0_i32 = arith.constant 0 : i32
    %c0_i32_0 = arith.constant 0 : i32
    %c0_i32_1 = arith.constant 0 : i32
    return %c0_i32, %c0_i32_0 : i32, i32
  }
  func.func @transform_3(%arg0: i32) -> (i32, i32) {
    %c0_i32 = arith.constant 0 : i32
    %c0_i32_0 = arith.constant 0 : i32
    %c0_i32_1 = arith.constant 0 : i32
    return %c0_i32, %c0_i32_0 : i32, i32
  }
  func.func @transform_4(%arg0: i32) -> (i32, i32) {
    %c0_i32 = arith.constant 0 : i32
    %c0_i32_0 = arith.constant 0 : i32
    %c0_i32_1 = arith.constant 0 : i32
    return %c0_i32, %c0_i32_0 : i32, i32
  }
  func.func @transform_5(%arg0: i32) -> (i32, i32) {
    %c0_i32 = arith.constant 0 : i32
    %c0_i32_0 = arith.constant 0 : i32
    %c0_i32_1 = arith.constant 0 : i32
    return %c0_i32, %c0_i32_0 : i32, i32
  }
  func.func @transform_6(%arg0: i32) -> (i32, i32) {
    %c0_i32 = arith.constant 0 : i32
    %c0_i32_0 = arith.constant 0 : i32
    %c0_i32_1 = arith.constant 0 : i32
    return %c0_i32, %c0_i32_0 : i32, i32
  }
  func.func @transform_7(%arg0: i32) -> (i32, i32) {
    %c0_i32 = arith.constant 0 : i32
    %c0_i32_0 = arith.constant 0 : i32
    %c0_i32_1 = arith.constant 0 : i32
    return %c0_i32, %c0_i32_0 : i32, i32
  }
  func.func @transform_8(%arg0: i32) -> (i32, i32) {
    %c0_i32 = arith.constant 0 : i32
    %c0_i32_0 = arith.constant 0 : i32
    %c0_i32_1 = arith.constant 0 : i32
    return %c0_i32, %c0_i32_0 : i32, i32
  }
  func.func @transform_9(%arg0: i32) -> (i32, i32) {
    %c0_i32 = arith.constant 0 : i32
    %c0_i32_0 = arith.constant 0 : i32
    %c0_i32_1 = arith.constant 0 : i32
    return %c0_i32, %c0_i32_0 : i32, i32
  }
  func.func @transform_10(%arg0: i32) -> (i32, i32, i32) {
    %c0_i32 = arith.constant 0 : i32
    %c0_i32_0 = arith.constant 0 : i32
    %c0_i32_1 = arith.constant 0 : i32
    return %arg0, %c0_i32, %c0_i32_0 : i32, i32, i32
  }
}

</mosaic_0001>

<llo_original>
// kernel: tpu_custom_call.1
$region0: #{tpu_custom_call.1}
  #allocation0 [shape = 'u32[]', space=smem, size = 0x4, offset = 0x4, fixed_abs, tag = 'smem constant byte address 0x4 - core index']
  #allocation1 [shape = 'u32[72,128]{1,0:T(1,128)}', space=vmem, size = 0x9000, scoped, tag = 'internal scratch']
  %s0 = inlined_call_operand.hbm [shape: f32[2,16,128], index: 0, kind: input, shape index: {}]
  %s1 = inlined_call_operand.hbm [shape: f32[2,16,16], index: 1, kind: input, shape index: {}]
  %s2 = inlined_call_operand.hbm [shape: f32[128,128], index: 2, kind: input, shape index: {}]
  %s3 = inlined_call_operand.vmem [shape: f32[1,128], index: 3, kind: input, shape index: {}]
  %s4 = inlined_call_operand.vmem [shape: f32[1,128], index: 4, kind: input, shape index: {}]
  %s5 = inlined_call_operand.vmem [shape: f32[1,128], index: 5, kind: input, shape index: {}]
  %s6 = inlined_call_operand.hbm [shape: f32[128,128], index: 6, kind: input, shape index: {}]
  %s7 = inlined_call_operand.vmem [shape: f32[1,128], index: 7, kind: input, shape index: {}]
  %s8 = inlined_call_operand.vmem [shape: f32[1,128], index: 8, kind: input, shape index: {}]
  %s9 = inlined_call_operand.vmem [shape: f32[1,128], index: 9, kind: input, shape index: {}]
  %s10 = inlined_call_operand.hbm [shape: f32[2,16,128], index: 10, kind: output, shape index: {}]
  %s11 = sld [smem:[#allocation0]]
  $region89: #{tpu_custom_call.1} parent=0
    _
  %s13 = ssub.s32 1, %s11
  %s14 = scalar_select 0, %s13, %s11
  $region1: #{tpu_custom_call.1} parent=0
    #allocation2 [shape = 'u8[16384]{0}', space=vmem, size = 0x4000, scoped, tag = 'input window, operand 0']
    #allocation3 [shape = 's32[2]{0}', space=sflag, size = 0x8, scoped, tag = 'scoped memory for tpu_custom_call.1']
    #allocation4 [shape = 's32[2]{0}', space=sflag, size = 0x8, scoped, tag = 'scoped memory for tpu_custom_call.1']
    #allocation5 [shape = 'u8[16384]{0}', space=vmem, size = 0x4000, scoped, tag = 'input window, operand 1']
    #allocation6 [shape = 's32[2]{0}', space=sflag, size = 0x8, scoped, tag = 'scoped memory for tpu_custom_call.1']
    #allocation7 [shape = 'u8[65536]{0}', space=vmem, size = 0x10000, scoped, tag = 'input window, operand 2, single buffered']
    #allocation8 [shape = 'u8[65536]{0}', space=vmem, size = 0x10000, scoped, tag = 'input window, operand 6, single buffered']
    #allocation9 [shape = 's32[1]{0}', space=sflag, size = 0x4, scoped, tag = 'scoped memory for tpu_custom_call.1']
    #allocation10 [shape = 'u8[16384]{0}', space=vmem, size = 0x4000, scoped, tag = 'output window, operand 0']
    %15 = vsyncpa [#allocation3], 0
    %s16 = scalar_lea.sflag [#allocation3], 1
    %17 = vsyncpa %s16, 0
    %18 = vsyncpa [#allocation6], 0
    %s19 = scalar_lea.sflag [#allocation6], 1
    %20 = vsyncpa %s19, 0
    %21 = vsyncpa [#allocation9], 0
    %22 = vsyncpa [#allocation4], 0
    %s23 = scalar_lea.sflag [#allocation4], 1
    %24 = vsyncpa %s23, 0
    loop: start=0, step=1, limit=4
    $region2: #{tpu_custom_call.1} parent=1 // loop_pre_header
      _
    $region3: #{tpu_custom_call.1} parent=1 // loop_header
      %s26 = sphi 0, %s30
      %p27 = scmp.ge.s32.totalorder %s26, 4
      %s36 = sphi 0, %s38
      %s39 = sphi 0, %s36
      %s40 = sphi 0, %s39
      %s56 = sphi 0, %s40
      %s62 = sphi 0, %s64
      %s65 = sphi 0, %s62
      %s66 = sphi 0, %s65
      %s82 = sphi 0, %s66
      %s86 = sphi 0, %s86
      %s88 = sphi 0, %s86
      %s89 = sphi 0, %s88
      %s103 = sphi 0, %s89
      %s107 = sphi 0, %s107
      %s109 = sphi 0, %s107
      %s110 = sphi 0, %s109
      %s124 = sphi 0, %s110
      %s128 = sphi 0, %s128
      %s130 = sphi 0, %s128
      %s131 = sphi 0, %s130
      %s145 = sphi 0, %s131
      %s149 = sphi 0, %s149
      %s151 = sphi 0, %s149
      %s152 = sphi 0, %s151
      %s166 = sphi 0, %s152
      %s170 = sphi 0, %s170
      %s172 = sphi 0, %s170
      %s173 = sphi 0, %s172
      %s187 = sphi 0, %s173
      %s191 = sphi 0, %s191
      %s193 = sphi 0, %s191
      %s194 = sphi 0, %s193
      %s208 = sphi 0, %s194
      %s212 = sphi 0, %s212
      %s214 = sphi 0, %s212
      %s215 = sphi 0, %s214
      %s229 = sphi 0, %s215
      %s233 = sphi 0, %s233
      %s235 = sphi 0, %s233
      %s236 = sphi 0, %s235
      %s250 = sphi 0, %s236
      %s256 = sphi 0, %s258
      %s259 = sphi 0, %s256
      %s260 = sphi 0, %s259
      %s276 = sphi 0, %s260
    $region4: #{tpu_custom_call.1} parent=1 // loop_header_branch
      %29 = sbr.rel (%p27) target = $region8
    $region5: #{tpu_custom_call.1} parent=1 // loop_body
      %s31 = ssub.s32 %s26, 1
      %s32 = ssub.s32 %s26, 2
      %s33 = sadd.s32 %s26, 1
      %s34 = ssub.s32 %s26, %s33
      %p35 = scmp.eq.s32.totalorder %s34, 0
      %s37 = sadd.s32 %s36, 1
      %s38 = scalar_select %p35, %s36, %s37
      %p41 = pneg %p35
      %p42 = scmp.eq.s32.totalorder %s26, 1
      %p43 = por %p41, %p42
      %p44 = scmp.ne.s32.totalorder %s36, %s39
      %p45 = scmp.eq.s32.totalorder %s26, 0
      %p46 = por %p44, %p45
      %p47 = scmp.ne.s32.totalorder %s36, %s39
      %p48 = scmp.eq.s32.totalorder %s31, 1
      %p49 = por %p47, %p48
      %p50 = scmp.ne.s32.totalorder %s39, %s40
      %p51 = scmp.eq.s32.totalorder %s31, 0
      %p52 = por %p50, %p51
      %p53 = scmp.ne.s32.totalorder %s39, %s40
      %p54 = scmp.eq.s32.totalorder %s32, 1
      %p55 = por %p53, %p54
      %p57 = scmp.ne.s32.totalorder %s40, %s56
      %p58 = scmp.eq.s32.totalorder %s32, 0
      %p59 = por %p57, %p58
      %s60 = ssub.s32 %s26, %s33
      %p61 = scmp.eq.s32.totalorder %s60, 0
      %s63 = sadd.s32 %s62, 1
      %s64 = scalar_select %p61, %s62, %s63
      %p67 = pneg %p61
      %p68 = scmp.eq.s32.totalorder %s26, 1
      %p69 = por %p67, %p68
      %p70 = scmp.ne.s32.totalorder %s62, %s65
      %p71 = scmp.eq.s32.totalorder %s26, 0
      %p72 = por %p70, %p71
      %p73 = scmp.ne.s32.totalorder %s62, %s65
      %p74 = scmp.eq.s32.totalorder %s31, 1
      %p75 = por %p73, %p74
      %p76 = scmp.ne.s32.totalorder %s65, %s66
      %p77 = scmp.eq.s32.totalorder %s31, 0
      %p78 = por %p76, %p77
      %p79 = scmp.ne.s32.totalorder %s65, %s66
      %p80 = scmp.eq.s32.totalorder %s32, 1
      %p81 = por %p79, %p80
      %p83 = scmp.ne.s32.totalorder %s66, %s82
      %p84 = scmp.eq.s32.totalorder %s32, 0
      %p85 = por %p83, %p84
      %s87 = sadd.s32 %s86, 1
      %p90 = scmp.eq.s32.totalorder %s26, 1
      %p91 = scmp.ne.s32.totalorder %s86, %s88
      %p92 = scmp.eq.s32.totalorder %s26, 0
      %p93 = por %p91, %p92
      %p94 = scmp.ne.s32.totalorder %s86, %s88
      %p95 = scmp.eq.s32.totalorder %s31, 1
      %p96 = por %p94, %p95
      %p97 = scmp.ne.s32.totalorder %s88, %s89
      %p98 = scmp.eq.s32.totalorder %s31, 0
      %p99 = por %p97, %p98
      %p100 = scmp.ne.s32.totalorder %s88, %s89
      %p101 = scmp.eq.s32.totalorder %s32, 1
      %p102 = por %p100, %p101
      %p104 = scmp.ne.s32.totalorder %s89, %s103
      %p105 = scmp.eq.s32.totalorder %s32, 0
      %p106 = por %p104, %p105
      %s108 = sadd.s32 %s107, 1
      %p111 = scmp.eq.s32.totalorder %s26, 1
      %p112 = scmp.ne.s32.totalorder %s107, %s109
      %p113 = scmp.eq.s32.totalorder %s26, 0
      %p114 = por %p112, %p113
      %p115 = scmp.ne.s32.totalorder %s107, %s109
      %p116 = scmp.eq.s32.totalorder %s31, 1
      %p117 = por %p115, %p116
      %p118 = scmp.ne.s32.totalorder %s109, %s110
      %p119 = scmp.eq.s32.totalorder %s31, 0
      %p120 = por %p118, %p119
      %p121 = scmp.ne.s32.totalorder %s109, %s110
      %p122 = scmp.eq.s32.totalorder %s32, 1
      %p123 = por %p121, %p122
      %p125 = scmp.ne.s32.totalorder %s110, %s124
      %p126 = scmp.eq.s32.totalorder %s32, 0
      %p127 = por %p125, %p126
      %s129 = sadd.s32 %s128, 1
      %p132 = scmp.eq.s32.totalorder %s26, 1
      %p133 = scmp.ne.s32.totalorder %s128, %s130
      %p134 = scmp.eq.s32.totalorder %s26, 0
      %p135 = por %p133, %p134
      %p136 = scmp.ne.s32.totalorder %s128, %s130
      %p137 = scmp.eq.s32.totalorder %s31, 1
      %p138 = por %p136, %p137
      %p139 = scmp.ne.s32.totalorder %s130, %s131
      %p140 = scmp.eq.s32.totalorder %s31, 0
      %p141 = por %p139, %p140
      %p142 = scmp.ne.s32.totalorder %s130, %s131
      %p143 = scmp.eq.s32.totalorder %s32, 1
      %p144 = por %p142, %p143
      %p146 = scmp.ne.s32.totalorder %s131, %s145
      %p147 = scmp.eq.s32.totalorder %s32, 0
      %p148 = por %p146, %p147
      %s150 = sadd.s32 %s149, 1
      %p153 = scmp.eq.s32.totalorder %s26, 1
      %p154 = scmp.ne.s32.totalorder %s149, %s151
      %p155 = scmp.eq.s32.totalorder %s26, 0
      %p156 = por %p154, %p155
      %p157 = scmp.ne.s32.totalorder %s149, %s151
      %p158 = scmp.eq.s32.totalorder %s31, 1
      %p159 = por %p157, %p158
      %p160 = scmp.ne.s32.totalorder %s151, %s152
      %p161 = scmp.eq.s32.totalorder %s31, 0
      %p162 = por %p160, %p161
      %p163 = scmp.ne.s32.totalorder %s151, %s152
      %p164 = scmp.eq.s32.totalorder %s32, 1
      %p165 = por %p163, %p164
      %p167 = scmp.ne.s32.totalorder %s152, %s166
      %p168 = scmp.eq.s32.totalorder %s32, 0
      %p169 = por %p167, %p168
      %s171 = sadd.s32 %s170, 1
      %p174 = scmp.eq.s32.totalorder %s26, 1
      %p175 = scmp.ne.s32.totalorder %s170, %s172
      %p176 = scmp.eq.s32.totalorder %s26, 0
      %p177 = por %p175, %p176
      %p178 = scmp.ne.s32.totalorder %s170, %s172
      %p179 = scmp.eq.s32.totalorder %s31, 1
      %p180 = por %p178, %p179
      %p181 = scmp.ne.s32.totalorder %s172, %s173
      %p182 = scmp.eq.s32.totalorder %s31, 0
      %p183 = por %p181, %p182
      %p184 = scmp.ne.s32.totalorder %s172, %s173
      %p185 = scmp.eq.s32.totalorder %s32, 1
      %p186 = por %p184, %p185
      %p188 = scmp.ne.s32.totalorder %s173, %s187
      %p189 = scmp.eq.s32.totalorder %s32, 0
      %p190 = por %p188, %p189
      %s192 = sadd.s32 %s191, 1
      %p195 = scmp.eq.s32.totalorder %s26, 1
      %p196 = scmp.ne.s32.totalorder %s191, %s193
      %p197 = scmp.eq.s32.totalorder %s26, 0
      %p198 = por %p196, %p197
      %p199 = scmp.ne.s32.totalorder %s191, %s193
      %p200 = scmp.eq.s32.totalorder %s31, 1
      %p201 = por %p199, %p200
      %p202 = scmp.ne.s32.totalorder %s193, %s194
      %p203 = scmp.eq.s32.totalorder %s31, 0
      %p204 = por %p202, %p203
      %p205 = scmp.ne.s32.totalorder %s193, %s194
      %p206 = scmp.eq.s32.totalorder %s32, 1
      %p207 = por %p205, %p206
      %p209 = scmp.ne.s32.totalorder %s194, %s208
      %p210 = scmp.eq.s32.totalorder %s32, 0
      %p211 = por %p209, %p210
      %s213 = sadd.s32 %s212, 1
      %p216 = scmp.eq.s32.totalorder %s26, 1
      %p217 = scmp.ne.s32.totalorder %s212, %s214
      %p218 = scmp.eq.s32.totalorder %s26, 0
      %p219 = por %p217, %p218
      %p220 = scmp.ne.s32.totalorder %s212, %s214
      %p221 = scmp.eq.s32.totalorder %s31, 1
      %p222 = por %p220, %p221
      %p223 = scmp.ne.s32.totalorder %s214, %s215
      %p224 = scmp.eq.s32.totalorder %s31, 0
      %p225 = por %p223, %p224
      %p226 = scmp.ne.s32.totalorder %s214, %s215
      %p227 = scmp.eq.s32.totalorder %s32, 1
      %p228 = por %p226, %p227
      %p230 = scmp.ne.s32.totalorder %s215, %s229
      %p231 = scmp.eq.s32.totalorder %s32, 0
      %p232 = por %p230, %p231
      %s234 = sadd.s32 %s233, 1
      %p237 = scmp.eq.s32.totalorder %s26, 1
      %p238 = scmp.ne.s32.totalorder %s233, %s235
      %p239 = scmp.eq.s32.totalorder %s26, 0
      %p240 = por %p238, %p239
      %p241 = scmp.ne.s32.totalorder %s233, %s235
      %p242 = scmp.eq.s32.totalorder %s31, 1
      %p243 = por %p241, %p242
      %p244 = scmp.ne.s32.totalorder %s235, %s236
      %p245 = scmp.eq.s32.totalorder %s31, 0
      %p246 = por %p244, %p245
      %p247 = scmp.ne.s32.totalorder %s235, %s236
      %p248 = scmp.eq.s32.totalorder %s32, 1
      %p249 = por %p247, %p248
      %p251 = scmp.ne.s32.totalorder %s236, %s250
      %p252 = scmp.eq.s32.totalorder %s32, 0
      %p253 = por %p251, %p252
      %s254 = ssub.s32 %s26, %s33
      %p255 = scmp.eq.s32.totalorder %s254, 0
      %s257 = sadd.s32 %s256, 1
      %s258 = scalar_select %p255, %s256, %s257
      %p261 = pneg %p255
      %p262 = scmp.eq.s32.totalorder %s26, 1
      %p263 = por %p261, %p262
      %p264 = scmp.ne.s32.totalorder %s256, %s259
      %p265 = scmp.eq.s32.totalorder %s26, 0
      %p266 = por %p264, %p265
      %p267 = scmp.ne.s32.totalorder %s256, %s259
      %p268 = scmp.eq.s32.totalorder %s31, 1
      %p269 = por %p267, %p268
      %p270 = scmp.ne.s32.totalorder %s259, %s260
      %p271 = scmp.eq.s32.totalorder %s31, 0
      %p272 = por %p270, %p271
      %p273 = scmp.ne.s32.totalorder %s259, %s260
      %p274 = scmp.eq.s32.totalorder %s32, 1
      %p275 = por %p273, %p274
      %p277 = scmp.ne.s32.totalorder %s260, %s276
      %p278 = scmp.eq.s32.totalorder %s32, 0
      %p279 = por %p277, %p278
      %p280 = scmp.le.s32.totalorder 1, %s26
      %p281 = scmp.lt.s32.totalorder %s26, 3
      %p282 = pnand %p280, %p281
      %p283 = pneg %p282
      // Predicated region
      $region9: #{tpu_custom_call.1} parent=5 // pred_check
        _
      $region10: #{tpu_custom_call.1} parent=5 // pred_check_branch
        %285 = sbr.rel (%p282) target = $region12
      $region11: #{tpu_custom_call.1} parent=5 // pred_region
        %s286 = ssub.s32 %s26, 1
        // Predicated region
        $region13: #{tpu_custom_call.1} parent=11 // pred_check
          %p287 = pneg %p99
        $region14: #{tpu_custom_call.1} parent=11 // pred_check_branch
          %289 = sbr.rel (%p287) target = $region16
        $region15: #{tpu_custom_call.1} parent=11 // pred_region
          %291 = vsyncadd [#allocation6], 0
          %s292 = sshll.u32 %s2, 4
          %s293 = int_to_ptr.hbm [resolvable:$true] %s292
          %s294 = sshll.u32 [#allocation7], 4
          %s295 = int_to_ptr.vmem [resolvable:$true] %s294
          %300 = dma.hbm_to_vmem [thread:$0]  %s293, 2048, %s295, [#allocation6], 128, 128, 8
        $region16: #{tpu_custom_call.1} parent=11 // pred_fallthru
          _
        // Predicated region
        $region17: #{tpu_custom_call.1} parent=11 // pred_check
          %p301 = pneg %p120
        $region18: #{tpu_custom_call.1} parent=11 // pred_check_branch
          %303 = sbr.rel (%p301) target = $region20
        $region19: #{tpu_custom_call.1} parent=11 // pred_region
          _
        $region20: #{tpu_custom_call.1} parent=11 // pred_fallthru
          _
        // Predicated region
        $region21: #{tpu_custom_call.1} parent=11 // pred_check
          %p304 = pneg %p141
        $region22: #{tpu_custom_call.1} parent=11 // pred_check_branch
          %306 = sbr.rel (%p304) target = $region24
        $region23: #{tpu_custom_call.1} parent=11 // pred_region
          _
        $region24: #{tpu_custom_call.1} parent=11 // pred_fallthru
          _
        // Predicated region
        $region25: #{tpu_custom_call.1} parent=11 // pred_check
          %p307 = pneg %p162
        $region26: #{tpu_custom_call.1} parent=11 // pred_check_branch
          %309 = sbr.rel (%p307) target = $region28
        $region27: #{tpu_custom_call.1} parent=11 // pred_region
          _
        $region28: #{tpu_custom_call.1} parent=11 // pred_fallthru
          _
        // Predicated region
        $region29: #{tpu_custom_call.1} parent=11 // pred_check
          %p310 = pneg %p183
        $region30: #{tpu_custom_call.1} parent=11 // pred_check_branch
          %312 = sbr.rel (%p310) target = $region32
        $region31: #{tpu_custom_call.1} parent=11 // pred_region
          %314 = vsyncadd [#allocation9], 0
          %s315 = sshll.u32 %s6, 4
          %s316 = int_to_ptr.hbm [resolvable:$true] %s315
          %s317 = sshll.u32 [#allocation8], 4
          %s318 = int_to_ptr.vmem [resolvable:$true] %s317
          %323 = dma.hbm_to_vmem [thread:$0]  %s316, 2048, %s318, [#allocation9], 128, 128, 8
        $region32: #{tpu_custom_call.1} parent=11 // pred_fallthru
          _
        // Predicated region
        $region33: #{tpu_custom_call.1} parent=11 // pred_check
          %p324 = pneg %p204
        $region34: #{tpu_custom_call.1} parent=11 // pred_check_branch
          %326 = sbr.rel (%p324) target = $region36
        $region35: #{tpu_custom_call.1} parent=11 // pred_region
          _
        $region36: #{tpu_custom_call.1} parent=11 // pred_fallthru
          _
        // Predicated region
        $region37: #{tpu_custom_call.1} parent=11 // pred_check
          %p327 = pneg %p225
        $region38: #{tpu_custom_call.1} parent=11 // pred_check_branch
          %329 = sbr.rel (%p327) target = $region40
        $region39: #{tpu_custom_call.1} parent=11 // pred_region
          _
        $region40: #{tpu_custom_call.1} parent=11 // pred_fallthru
          _
        // Predicated region
        $region41: #{tpu_custom_call.1} parent=11 // pred_check
          %p330 = pneg %p246
        $region42: #{tpu_custom_call.1} parent=11 // pred_check_branch
          %332 = sbr.rel (%p330) target = $region44
        $region43: #{tpu_custom_call.1} parent=11 // pred_region
          _
        $region44: #{tpu_custom_call.1} parent=11 // pred_fallthru
          _
      $region12: #{tpu_custom_call.1} parent=5 // pred_fallthru
        _
      %p333 = scmp.lt.s32.totalorder %s26, 2
      // Predicated region
      $region45: #{tpu_custom_call.1} parent=5 // pred_check
        %p334 = pneg %p333
      $region46: #{tpu_custom_call.1} parent=5 // pred_check_branch
        %336 = sbr.rel (%p334) target = $region48
      $region47: #{tpu_custom_call.1} parent=5 // pred_region
        // Predicated region
        $region49: #{tpu_custom_call.1} parent=47 // pred_check
          %p337 = pneg %p46
        $region50: #{tpu_custom_call.1} parent=47 // pred_check_branch
          %339 = sbr.rel (%p337) target = $region52
        $region51: #{tpu_custom_call.1} parent=47 // pred_region
          %s340 = sand.u32 %s36, 1
          %s341 = scalar_lea.sflag [#allocation3], %s340
          %s342 = sand.u32 %s36, 1
          %s343 = smul.addr %s342, 16
          %s344 = scalar_lea.vmem [#allocation2], %s343
          %346 = vsyncadd %s341, 0
          %s347 = smul.addr %s26, 2
          %s348 = smul.addr %s347, 8
          %s349 = scalar_lea.hbm %s0, %s348
          %s350 = sshll.u32 %s349, 4
          %s351 = int_to_ptr.hbm [resolvable:$true] %s350
          %s352 = sshll.u32 %s344, 4
          %s353 = int_to_ptr.vmem [resolvable:$true] %s352
          %358 = dma.hbm_to_vmem [thread:$0]  %s351, 256, %s353, %s341, 128, 128, 8
        $region52: #{tpu_custom_call.1} parent=47 // pred_fallthru
          _
        // Predicated region
        $region53: #{tpu_custom_call.1} parent=47 // pred_check
          %p359 = pneg %p72
        $region54: #{tpu_custom_call.1} parent=47 // pred_check_branch
          %361 = sbr.rel (%p359) target = $region56
        $region55: #{tpu_custom_call.1} parent=47 // pred_region
          %s362 = sand.u32 %s26, 1
          %s363 = scalar_lea.sflag [#allocation6], %s362
          %s364 = sand.u32 %s62, 1
          %s365 = smul.addr %s364, 16
          %s366 = scalar_lea.vmem [#allocation5], %s365
          %368 = vsyncadd %s363, 0
          %s369 = smul.addr %s26, 2
          %s370 = smul.addr %s369, 8
          %s371 = scalar_lea.hbm %s1, %s370
          %s372 = sshll.u32 %s371, 4
          %s373 = int_to_ptr.hbm [resolvable:$true] %s372
          %s374 = sshll.u32 %s366, 4
          %s375 = int_to_ptr.vmem [resolvable:$true] %s374
          %380 = dma.hbm_to_vmem [thread:$0]  %s373, 256, %s375, %s363, 128, 128, 8
        $region56: #{tpu_custom_call.1} parent=47 // pred_fallthru
          _
      $region48: #{tpu_custom_call.1} parent=5 // pred_fallthru
        _
      %p381 = scmp.le.s32.totalorder 1, %s26
      %p382 = scmp.lt.s32.totalorder %s26, 3
      %p383 = pnand %p381, %p382
      %p384 = pneg %p383
      // Predicated region
      $region57: #{tpu_custom_call.1} parent=5 // pred_check
        _
      $region58: #{tpu_custom_call.1} parent=5 // pred_check_branch
        %386 = sbr.rel (%p383) target = $region60
      $region59: #{tpu_custom_call.1} parent=5 // pred_region
        %s387 = ssub.s32 %s26, 1
        %s388 = sand.u32 %s39, 1
        %s389 = scalar_lea.sflag [#allocation3], %s388
        %s390 = sand.u32 %s39, 1
        %s391 = smul.addr %s390, 16
        %s392 = scalar_lea.vmem [#allocation2], %s391
        // Predicated region
        $region61: #{tpu_custom_call.1} parent=59 // pred_check
          %p393 = pneg %p52
        $region62: #{tpu_custom_call.1} parent=59 // pred_check_branch
          %395 = sbr.rel (%p393) target = $region64
        $region63: #{tpu_custom_call.1} parent=59 // pred_region
          %397 = dma.done %s389, 256
        $region64: #{tpu_custom_call.1} parent=59 // pred_fallthru
          _
        %s398 = sand.u32 %s31, 1
        %s399 = scalar_lea.sflag [#allocation6], %s398
        %s400 = sand.u32 %s65, 1
        %s401 = smul.addr %s400, 16
        %s402 = scalar_lea.vmem [#allocation5], %s401
        // Predicated region
        $region65: #{tpu_custom_call.1} parent=59 // pred_check
          %p403 = pneg %p78
        $region66: #{tpu_custom_call.1} parent=59 // pred_check_branch
          %405 = sbr.rel (%p403) target = $region68
        $region67: #{tpu_custom_call.1} parent=59 // pred_region
          %407 = dma.done %s399, 256
        $region68: #{tpu_custom_call.1} parent=59 // pred_fallthru
          _
        // Predicated region
        $region69: #{tpu_custom_call.1} parent=59 // pred_check
          %p408 = pneg %p99
        $region70: #{tpu_custom_call.1} parent=59 // pred_check_branch
          %410 = sbr.rel (%p408) target = $region72
        $region71: #{tpu_custom_call.1} parent=59 // pred_region
          %412 = dma.done [#allocation6], 2048
        $region72: #{tpu_custom_call.1} parent=59 // pred_fallthru
          _
        // Predicated region
        $region73: #{tpu_custom_call.1} parent=59 // pred_check
          %p413 = pneg %p183
        $region74: #{tpu_custom_call.1} parent=59 // pred_check_branch
          %415 = sbr.rel (%p413) target = $region76
        $region75: #{tpu_custom_call.1} parent=59 // pred_region
          %417 = dma.done [#allocation9], 2048
        $region76: #{tpu_custom_call.1} parent=59 // pred_fallthru
          _
        %s418 = sand.u32 %s39, 1
        %s419 = scalar_lea.sflag [#allocation3], %s418
        %s420 = sand.u32 %s39, 1
        %s421 = smul.addr %s420, 16
        %s422 = scalar_lea.vmem [#allocation2], %s421
        %p423 = pneg %p52
        %p424 = pneg %p49
        %s425 = sand.u32 %s31, 1
        %s426 = scalar_lea.sflag [#allocation6], %s425
        %s427 = sand.u32 %s65, 1
        %s428 = smul.addr %s427, 16
        %s429 = scalar_lea.vmem [#allocation5], %s428
        %p430 = pneg %p78
        %p431 = pneg %p75
        %p432 = pneg %p99
        %p433 = pneg %p96
        %p434 = pneg %p120
        %p435 = pneg %p117
        %p436 = pneg %p141
        %p437 = pneg %p138
        %p438 = pneg %p162
        %p439 = pneg %p159
        %p440 = pneg %p183
        %p441 = pneg %p180
        %p442 = pneg %p204
        %p443 = pneg %p201
        %p444 = pneg %p225
        %p445 = pneg %p222
        %p446 = pneg %p246
        %p447 = pneg %p243
        %p448 = pneg %p272
        %p449 = pneg %p269
        %s450 = sand.u32 %s259, 1
        %s451 = scalar_lea.sflag [#allocation4], %s450
        %s452 = sand.u32 %s259, 1
        %s453 = smul.addr %s452, 16
        %s454 = scalar_lea.vmem [#allocation10], %s453
        %v455 = vld [vmem:[%s392] sm:$0xff]
        %v456 = vld [vmem:[%s392 + $0x8] sm:$0xff]
        %v457 = vld [vmem:[%s402] sm:$0xff]
        %v458 = vld [vmem:[%s402 + $0x8] sm:$0xff]
        %459 = vxpose.xlu0.b32.start [1/16] %v457, 128
        %460 = vxpose.xlu0.b32.cont [2/16] %v458, 128
        %461 = vxpose.xlu0.b32.cont [3/16] 0.0, 128
        %462 = vxpose.xlu0.b32.cont [4/16] 0.0, 128
        %463 = vxpose.xlu0.b32.cont [5/16] 0.0, 128
        %464 = vxpose.xlu0.b32.cont [6/16] 0.0, 128
        %465 = vxpose.xlu0.b32.cont [7/16] 0.0, 128
        %466 = vxpose.xlu0.b32.cont [8/16] 0.0, 128
        %467 = vxpose.xlu0.b32.cont [9/16] 0.0, 128
        %468 = vxpose.xlu0.b32.cont [10/16] 0.0, 128
        %469 = vxpose.xlu0.b32.cont [11/16] 0.0, 128
        %470 = vxpose.xlu0.b32.cont [12/16] 0.0, 128
        %471 = vxpose.xlu0.b32.cont [13/16] 0.0, 128
        %472 = vxpose.xlu0.b32.cont [14/16] 0.0, 128
        %473 = vxpose.xlu0.b32.cont [15/16] 0.0, 128
        %474 = vxpose.xlu0.b32.end [16/16] 0.0, 128
        %v475 = vpop.trf.xlu0
        %v476 = vpop.trf.xlu0
        %v477 = vpop.trf.xlu0
        %v478 = vpop.trf.xlu0
        %v479 = vpop.trf.xlu0
        %v480 = vpop.trf.xlu0
        %v481 = vpop.trf.xlu0
        %v482 = vpop.trf.xlu0
        %v483 = vpop.trf.xlu0
        %v484 = vpop.trf.xlu0
        %v485 = vpop.trf.xlu0
        %v486 = vpop.trf.xlu0
        %v487 = vpop.trf.xlu0
        %v488 = vpop.trf.xlu0
        %v489 = vpop.trf.xlu0
        %v490 = vpop.trf.xlu0
        %vm491 = vcmask 130048
        %v493 = vsel %vm491, %v475, 0
        %v496 = vsel %vm491, %v476, 0
        %498 = vmatpush.msra.mxu0 0.0
        %499 = vmatpush.msra.mxu0 0.0
        %500 = vmatpush.msra.mxu0 0.0
        %501 = vmatpush.msra.mxu0 0.0
        %502 = vmatpush.msra.mxu0 0.0
        %503 = vmatpush.msra.mxu0 0.0
        %504 = vmatpush.msra.mxu0 0.0
        %505 = vmatpush.msra.mxu0 0.0
        %506 = vmatpush.msra.mxu0 0.0
        %507 = vmatpush.msra.mxu0 0.0
        %508 = vmatpush.msra.mxu0 0.0
        %509 = vmatpush.msra.mxu0 0.0
        %510 = vmatpush.msra.mxu0 0.0
        %511 = vmatpush.msra.mxu0 0.0
        %512 = vmatpush.msra.mxu0 1.0
        %513 = vmatpush.msra.mxu0 1.0
        %514 = vmatmul.f32.gmra.mxu0 %v493
        %v515 = vpop.f32.mrf.mxu0
        %v516 = vadd.f32 1.0, %v515
        %517 = vmatmul.f32.gmra.mxu0 %v496
        %v518 = vpop.f32.mrf.mxu0
        %v519 = vadd.f32 1.0, %v518
        %520 = vdwg.mxu0
        %v521 = vrsqrt.pop %v516
        %v522 = vmul.f32 %v521, %v516
        %v523 = vmul.f32 %v522, %v521
        %v524 = vmul.f32 0.5, %v523
        %v525 = vsub.f32 1.5, %v524
        %v526 = vmul.f32 %v521, %v525
        %vm527 = vweird.f32 %v516
        %vm528 = vweird.f32 %v521
        %vm529 = vmor %vm527, %vm528
        %v530 = vsel %vm529, %v521, %v526
        %v531 = vrsqrt.pop %v519
        %v532 = vmul.f32 %v531, %v519
        %v533 = vmul.f32 %v532, %v531
        %v534 = vmul.f32 0.5, %v533
        %v535 = vsub.f32 1.5, %v534
        %v536 = vmul.f32 %v531, %v535
        %vm537 = vweird.f32 %v519
        %vm538 = vweird.f32 %v531
        %vm539 = vmor %vm537, %vm538
        %v540 = vsel %vm539, %v531, %v536
        %v541 = vld [vmem:[#allocation7] sm:$0xff]
        %v542 = vld [vmem:[#allocation7 + $0x8] sm:$0xff]
        %v543 = vld [vmem:[#allocation7 + $0x10] sm:$0xff]
        %v544 = vld [vmem:[#allocation7 + $0x18] sm:$0xff]
        %v545 = vld [vmem:[#allocation7 + $0x20] sm:$0xff]
        %v546 = vld [vmem:[#allocation7 + $0x28] sm:$0xff]
        %v547 = vld [vmem:[#allocation7 + $0x30] sm:$0xff]
        %v548 = vld [vmem:[#allocation7 + $0x38] sm:$0xff]
        %v549 = vld [vmem:[#allocation7 + $0x40] sm:$0xff]
        %v550 = vld [vmem:[#allocation7 + $0x48] sm:$0xff]
        %v551 = vld [vmem:[#allocation7 + $0x50] sm:$0xff]
        %v552 = vld [vmem:[#allocation7 + $0x58] sm:$0xff]
        %v553 = vld [vmem:[#allocation7 + $0x60] sm:$0xff]
        %v554 = vld [vmem:[#allocation7 + $0x68] sm:$0xff]
        %v555 = vld [vmem:[#allocation7 + $0x70] sm:$0xff]
        %v556 = vld [vmem:[#allocation7 + $0x78] sm:$0xff]
        %v557 = vld [vmem:[%s3] sm:$0x1]
        %558 = vmatpush.msra.mxu0 %v556
        %559 = vmatpush.msra.mxu0 %v555
        %560 = vmatpush.msra.mxu0 %v554
        %561 = vmatpush.msra.mxu0 %v553
        %562 = vmatpush.msra.mxu0 %v552
        %563 = vmatpush.msra.mxu0 %v551
        %564 = vmatpush.msra.mxu0 %v550
        %565 = vmatpush.msra.mxu0 %v549
        %566 = vmatpush.msra.mxu0 %v548
        %567 = vmatpush.msra.mxu0 %v547
        %568 = vmatpush.msra.mxu0 %v546
        %569 = vmatpush.msra.mxu0 %v545
        %570 = vmatpush.msra.mxu0 %v544
        %571 = vmatpush.msra.mxu0 %v543
        %572 = vmatpush.msra.mxu0 %v542
        %573 = vmatpush.msra.mxu0 %v541
        %574 = vmatmul.f32.gmra.mxu0 %v455
        %v575 = vpop.f32.mrf.mxu0
        %v576 = vadd.f32 0.0, %v575
        %577 = vmatmul.f32.gmra.mxu0 %v456
        %v578 = vpop.f32.mrf.mxu0
        %v579 = vadd.f32 0.0, %v578
        %580 = vdwg.mxu0
        %582 = vset.pattern.permute.xlu0 0
        %583 = vperm.xlu0 %582, %v530
        %v584 = vpop.permute.xlu0 %583
        %587 = vset.pattern.permute.xlu0 0
        %588 = vperm.xlu0 %587, %v540
        %v589 = vpop.permute.xlu0 %588
        %v591 = vmul.f32 %v584, %v576
        %v592 = vmul.f32 %v589, %v579
        %593 = vmatpush.msra.mxu0 0.0
        %594 = vmatpush.msra.mxu0 0.0
        %595 = vmatpush.msra.mxu0 0.0
        %596 = vmatpush.msra.mxu0 0.0
        %597 = vmatpush.msra.mxu0 0.0
        %598 = vmatpush.msra.mxu0 0.0
        %599 = vmatpush.msra.mxu0 0.0
        %600 = vmatpush.msra.mxu0 0.0
        %601 = vmatpush.msra.mxu0 0.0
        %602 = vmatpush.msra.mxu0 0.0
        %603 = vmatpush.msra.mxu0 0.0
        %604 = vmatpush.msra.mxu0 0.0
        %605 = vmatpush.msra.mxu0 0.0
        %606 = vmatpush.msra.mxu0 0.0
        %607 = vmatpush.msra.mxu0 %v592
        %608 = vmatpush.msra.mxu0 %v591
        %609 = vmatmul.f32.gmra.mxu0 %v493
        %v610 = vpop.f32.mrf.mxu0
        %v611 = vadd.f32 %v591, %v610
        %612 = vmatmul.f32.gmra.mxu0 %v496
        %v613 = vpop.f32.mrf.mxu0
        %v614 = vadd.f32 %v592, %v613
        %615 = vdwg.mxu0
        %v616 = vmul.f32 %v584, %v611
        %v617 = vmul.f32 %v589, %v614
        %v619 = vperm.slane %v557, 0
        %v621 = vadd.f32 %v616, %v619
        %v622 = vadd.f32 %v617, %v619
        %v623 = vld [vmem:[%s4] sm:$0x1]
        %v624 = vld [vmem:[%s5] sm:$0x1]
        %v625 = vadd.f32 %v621, %v622
        %v626 = vrot.slane %v625, 4
        %v627 = vadd.f32 %v625, %v626
        %v628 = vrot.slane %v627, 2
        %v629 = vadd.f32 %v627, %v628
        %v630 = vrot.slane %v629, 1
        %v631 = vadd.f32 %v629, %v630
        %v632 = vrcp.pop 16.0
        %v633 = vmul.f32 16.0, %v632
        %v634 = vsub.f32 1.0, %v633
        %v635 = vmul.f32 %v632, %v634
        %v636 = vadd.f32 %v632, %v635
        %vm637 = vweird.f32 %v632
        %v638 = vsel %vm637, %v632, %v636
        %v639 = vmul.f32 %v631, %v638
        %v640 = vmul.f32 %v621, %v621
        %v641 = vmul.f32 %v622, %v622
        %v642 = vadd.f32 %v640, %v641
        %v643 = vrot.slane %v642, 4
        %v644 = vadd.f32 %v642, %v643
        %v645 = vrot.slane %v644, 2
        %v646 = vadd.f32 %v644, %v645
        %v647 = vrot.slane %v646, 1
        %v648 = vadd.f32 %v646, %v647
        %v649 = vmul.f32 %v648, %v638
        %v650 = vmul.f32 %v639, %v639
        %v651 = vsub.f32 %v649, %v650
        %v652 = vsub.f32 %v621, %v639
        %v653 = vsub.f32 %v622, %v639
        %v654 = vadd.f32 %v651, 1e-05
        %v655 = vrsqrt.pop %v654
        %v656 = vmul.f32 %v655, %v654
        %v657 = vmul.f32 %v656, %v655
        %v658 = vmul.f32 0.5, %v657
        %v659 = vsub.f32 1.5, %v658
        %v660 = vmul.f32 %v655, %v659
        %vm661 = vweird.f32 %v654
        %vm662 = vweird.f32 %v655
        %vm663 = vmor %vm661, %vm662
        %v664 = vsel %vm663, %v655, %v660
        %v665 = vmul.f32 %v652, %v664
        %v666 = vmul.f32 %v653, %v664
        %v668 = vperm.slane %v623, 0
        %v670 = vmul.f32 %v665, %v668
        %v671 = vmul.f32 %v666, %v668
        %v673 = vperm.slane %v624, 0
        %v675 = vadd.f32 %v670, %v673
        %v676 = vadd.f32 %v671, %v673
        %v677 = vmax.f32 %v675, 0.0
        %v678 = vmax.f32 %v676, 0.0
        %v679 = vld [vmem:[#allocation8] sm:$0xff]
        %v680 = vld [vmem:[#allocation8 + $0x8] sm:$0xff]
        %v681 = vld [vmem:[#allocation8 + $0x10] sm:$0xff]
        %v682 = vld [vmem:[#allocation8 + $0x18] sm:$0xff]
        %v683 = vld [vmem:[#allocation8 + $0x20] sm:$0xff]
        %v684 = vld [vmem:[#allocation8 + $0x28] sm:$0xff]
        %v685 = vld [vmem:[#allocation8 + $0x30] sm:$0xff]
        %v686 = vld [vmem:[#allocation8 + $0x38] sm:$0xff]
        %v687 = vld [vmem:[#allocation8 + $0x40] sm:$0xff]
        %v688 = vld [vmem:[#allocation8 + $0x48] sm:$0xff]
        %v689 = vld [vmem:[#allocation8 + $0x50] sm:$0xff]
        %v690 = vld [vmem:[#allocation8 + $0x58] sm:$0xff]
        %v691 = vld [vmem:[#allocation8 + $0x60] sm:$0xff]
        %v692 = vld [vmem:[#allocation8 + $0x68] sm:$0xff]
        %v693 = vld [vmem:[#allocation8 + $0x70] sm:$0xff]
        %v694 = vld [vmem:[#allocation8 + $0x78] sm:$0xff]
        %v695 = vld [vmem:[%s7] sm:$0x1]
        %696 = vmatpush.msra.mxu0 %v694
        %697 = vmatpush.msra.mxu0 %v693
        %698 = vmatpush.msra.mxu0 %v692
        %699 = vmatpush.msra.mxu0 %v691
        %700 = vmatpush.msra.mxu0 %v690
        %701 = vmatpush.msra.mxu0 %v689
        %702 = vmatpush.msra.mxu0 %v688
        %703 = vmatpush.msra.mxu0 %v687
        %704 = vmatpush.msra.mxu0 %v686
        %705 = vmatpush.msra.mxu0 %v685
        %706 = vmatpush.msra.mxu0 %v684
        %707 = vmatpush.msra.mxu0 %v683
        %708 = vmatpush.msra.mxu0 %v682
        %709 = vmatpush.msra.mxu0 %v681
        %710 = vmatpush.msra.mxu0 %v680
        %711 = vmatpush.msra.mxu0 %v679
        %712 = vmatmul.f32.gmra.mxu0 %v677
        %v713 = vpop.f32.mrf.mxu0
        %v714 = vadd.f32 0.0, %v713
        %715 = vmatmul.f32.gmra.mxu0 %v678
        %v716 = vpop.f32.mrf.mxu0
        %v717 = vadd.f32 0.0, %v716
        %718 = vdwg.mxu0
        %v719 = vmul.f32 %v584, %v714
        %v720 = vmul.f32 %v589, %v717
        %721 = vmatpush.msra.mxu0 0.0
        %722 = vmatpush.msra.mxu0 0.0
        %723 = vmatpush.msra.mxu0 0.0
        %724 = vmatpush.msra.mxu0 0.0
        %725 = vmatpush.msra.mxu0 0.0
        %726 = vmatpush.msra.mxu0 0.0
        %727 = vmatpush.msra.mxu0 0.0
        %728 = vmatpush.msra.mxu0 0.0
        %729 = vmatpush.msra.mxu0 0.0
        %730 = vmatpush.msra.mxu0 0.0
        %731 = vmatpush.msra.mxu0 0.0
        %732 = vmatpush.msra.mxu0 0.0
        %733 = vmatpush.msra.mxu0 0.0
        %734 = vmatpush.msra.mxu0 0.0
        %735 = vmatpush.msra.mxu0 %v720
        %736 = vmatpush.msra.mxu0 %v719
        %737 = vmatmul.f32.gmra.mxu0 %v493
        %v738 = vpop.f32.mrf.mxu0
        %v739 = vadd.f32 %v719, %v738
        %740 = vmatmul.f32.gmra.mxu0 %v496
        %v741 = vpop.f32.mrf.mxu0
        %v742 = vadd.f32 %v720, %v741
        %743 = vdwg.mxu0
        %v744 = vmul.f32 %v584, %v739
        %v745 = vmul.f32 %v589, %v742
        %v747 = vperm.slane %v695, 0
        %v749 = vadd.f32 %v744, %v747
        %v750 = vadd.f32 %v745, %v747
        %v751 = vld [vmem:[%s8] sm:$0x1]
        %v752 = vld [vmem:[%s9] sm:$0x1]
        %v753 = vadd.f32 %v749, %v750
        %v754 = vrot.slane %v753, 4
        %v755 = vadd.f32 %v753, %v754
        %v756 = vrot.slane %v755, 2
        %v757 = vadd.f32 %v755, %v756
        %v758 = vrot.slane %v757, 1
        %v759 = vadd.f32 %v757, %v758
        %v760 = vmul.f32 %v759, %v638
        %v761 = vmul.f32 %v749, %v749
        %v762 = vmul.f32 %v750, %v750
        %v763 = vadd.f32 %v761, %v762
        %v764 = vrot.slane %v763, 4
        %v765 = vadd.f32 %v763, %v764
        %v766 = vrot.slane %v765, 2
        %v767 = vadd.f32 %v765, %v766
        %v768 = vrot.slane %v767, 1
        %v769 = vadd.f32 %v767, %v768
        %v770 = vmul.f32 %v769, %v638
        %v771 = vmul.f32 %v760, %v760
        %v772 = vsub.f32 %v770, %v771
        %v773 = vsub.f32 %v749, %v760
        %v774 = vsub.f32 %v750, %v760
        %v775 = vadd.f32 %v772, 1e-05
        %v776 = vrsqrt.pop %v775
        %v777 = vmul.f32 %v776, %v775
        %v778 = vmul.f32 %v777, %v776
        %v779 = vmul.f32 0.5, %v778
        %v780 = vsub.f32 1.5, %v779
        %v781 = vmul.f32 %v776, %v780
        %vm782 = vweird.f32 %v775
        %vm783 = vweird.f32 %v776
        %vm784 = vmor %vm782, %vm783
        %v785 = vsel %vm784, %v776, %v781
        %v786 = vmul.f32 %v773, %v785
        %v787 = vmul.f32 %v774, %v785
        %v789 = vperm.slane %v751, 0
        %v791 = vmul.f32 %v786, %v789
        %v792 = vmul.f32 %v787, %v789
        %v794 = vperm.slane %v752, 0
        %v796 = vadd.f32 %v791, %v794
        %v797 = vadd.f32 %v792, %v794
        %798 = vst [vmem:[%s454] sm:$0xff] %v796
        %799 = vst [vmem:[%s454 + $0x8] sm:$0xff] %v797
        %s800 = sand.u32 %s259, 1
        %s801 = scalar_lea.sflag [#allocation4], %s800
        %s802 = sand.u32 %s259, 1
        %s803 = smul.addr %s802, 16
        %s804 = scalar_lea.vmem [#allocation10], %s803
        // Predicated region
        $region77: #{tpu_custom_call.1} parent=59 // pred_check
          %p805 = pneg %p269
        $region78: #{tpu_custom_call.1} parent=59 // pred_check_branch
          %807 = sbr.rel (%p805) target = $region80
        $region79: #{tpu_custom_call.1} parent=59 // pred_region
          %809 = vsyncadd %s801, 0
          %s810 = smul.addr %s31, 2
          %s811 = smul.addr %s810, 8
          %s812 = scalar_lea.hbm %s10, %s811
          %s813 = sshll.u32 %s804, 4
          %s814 = int_to_ptr.vmem [resolvable:$true] %s813
          %s815 = sshll.u32 %s812, 4
          %s816 = int_to_ptr.hbm [resolvable:$true] %s815
          %821 = dma.vmem_to_hbm [thread:$0]  %s814, 256, %s816, %s801, 128, 128, 8
        $region80: #{tpu_custom_call.1} parent=59 // pred_fallthru
          _
      $region60: #{tpu_custom_call.1} parent=5 // pred_fallthru
        _
      %p822 = scmp.le.s32.totalorder 2, %s26
      // Predicated region
      $region81: #{tpu_custom_call.1} parent=5 // pred_check
        %p823 = pneg %p822
      $region82: #{tpu_custom_call.1} parent=5 // pred_check_branch
        %825 = sbr.rel (%p823) target = $region84
      $region83: #{tpu_custom_call.1} parent=5 // pred_region
        %s826 = ssub.s32 %s26, 2
        // Predicated region
        $region85: #{tpu_custom_call.1} parent=83 // pred_check
          %p827 = pneg %p275
        $region86: #{tpu_custom_call.1} parent=83 // pred_check_branch
          %829 = sbr.rel (%p827) target = $region88
        $region87: #{tpu_custom_call.1} parent=83 // pred_region
          %s830 = sand.u32 %s260, 1
          %s831 = scalar_lea.sflag [#allocation4], %s830
          %s832 = sand.u32 %s260, 1
          %s833 = smul.addr %s832, 16
          %s834 = scalar_lea.vmem [#allocation10], %s833
          %836 = dma.done %s831, 256
        $region88: #{tpu_custom_call.1} parent=83 // pred_fallthru
          _
      $region84: #{tpu_custom_call.1} parent=5 // pred_fallthru
        _
    $region6: #{tpu_custom_call.1} parent=1 // loop_footer
      %s30 = sadd.s32 1, %s26
    $region7: #{tpu_custom_call.1} parent=1 // loop_footer_branch
      %25 = sbr.rel target = $region3
    $region8: #{tpu_custom_call.1} parent=1 // loop_exit
      _
    %837 = vsyncpa [#allocation3], 1
    %s838 = scalar_lea.sflag [#allocation3], 1
    %839 = vsyncpa %s838, 1
    %840 = vsyncpa [#allocation6], 1
    %s841 = scalar_lea.sflag [#allocation6], 1
    %842 = vsyncpa %s841, 1
    %843 = vsyncpa [#allocation9], 1
    %844 = vsyncpa [#allocation4], 1
    %s845 = scalar_lea.sflag [#allocation4], 1
    %846 = vsyncpa %s845, 1

</llo_original>
